<compile_context>
chip_gen: v7x
topology: tpu7x:2x2x1
jax: 0.10.0
libtpu: 0.0.40
codegen_flags: <defaults>
</compile_context>

<pallas_src>
import jax
import jax.numpy as jnp
from jax import lax
from jax.experimental import pallas as pl
from jax.experimental.pallas import tpu as pltpu  # noqa: F401  (TPU backend)


def s_kernel(x_ref, w_ref, gamma_ref, beta_ref, o_ref):
    # x:     (B, in_dim)
    # w:     (hidden, in_dim)   -- PyTorch Linear layout, no transpose needed
    # gamma: (1, hidden)
    # beta:  (1, hidden)
    # o:     (B, hidden)

    # Linear: x @ w.T via dot_general contracting on axis 1 of both operands.
    # Bias omitted: cancelled exactly by the training-mode BN mean subtraction.
    y = lax.dot_general(
        x_ref[...], w_ref[...],
        dimension_numbers=(((1,), (1,)), ((), ())),
        preferred_element_type=jnp.float32,
    )  # (B, hidden), f32 accumulation on the MXU

    # BatchNorm1d, training mode, biased variance (two-pass: robust to
    # cancellation, matches the reference formula exactly).
    inv_n = 1.0 / y.shape[0]  # static
    mean = jnp.sum(y, axis=0, keepdims=True) * inv_n
    d = y - mean
    var = jnp.sum(d * d, axis=0, keepdims=True) * inv_n

    # gamma * rsqrt(var + eps) folded into one per-feature scale; with the
    # centered form the affine part is just `* scale + beta`.
    scale = gamma_ref[...] * lax.rsqrt(var + 1e-5)
    z = d * scale + beta_ref[...]

    # Exact sigmoid via the tanh identity: one EUP push per vreg, no
    # approximate-reciprocal error.
    o_ref[...] = (0.5 * (1.0 + jnp.tanh(0.5 * z))).astype(o_ref.dtype)


def s_forward(x, w, b, gamma, beta):
    """Fused Linear -> BatchNorm1d (training mode) -> Sigmoid.

    x: (B, in_dim); w: (hidden, in_dim); b/gamma/beta: (hidden,).
    `b` is accepted for module parity but unused: training-mode BN subtracts
    the batch mean, which cancels a per-feature additive bias exactly.
    """
    del b  # algebraically cancelled by the BN mean subtraction (training mode)
    B, in_dim = x.shape
    hidden = w.shape[0]

    g2 = gamma.reshape(1, hidden)   # metadata-only reshape, no data movement
    be2 = beta.reshape(1, hidden)

    cost = pl.CostEstimate(
        flops=2 * B * in_dim * hidden,
        transcendentals=B * hidden,
        bytes_accessed=4 * (B * in_dim + hidden * in_dim + 2 * hidden + B * hidden),
    )

    return pl.pallas_call(
        s_kernel,
        out_shape=jax.ShapeDtypeStruct((B, hidden), jnp.float32),
        in_specs=[
            pl.BlockSpec((B, in_dim), lambda: (0, 0)),
            pl.BlockSpec((hidden, in_dim), lambda: (0, 0)),
            pl.BlockSpec((1, hidden), lambda: (0, 0)),
            pl.BlockSpec((1, hidden), lambda: (0, 0)),
        ],
        out_specs=pl.BlockSpec((B, hidden), lambda: (0, 0)),
        cost_estimate=cost,
    )(x, w, g2, be2)


def _ref_forward(x, w, b, gamma, beta):
    # Pure-JAX reference (PyTorch semantics, training-mode BN, bias included).
    y = x @ w.T + b
    mean = jnp.mean(y, axis=0, keepdims=True)
    var = jnp.mean((y - mean) ** 2, axis=0, keepdims=True)
    y_hat = (y - mean) / jnp.sqrt(var + 1e-5)
    z = gamma * y_hat + beta
    return 1.0 / (1.0 + jnp.exp(-z))


if __name__ == "__main__":
    # Small shapes implied by the module: batch=8, in_dim=16, n_hidden_1=32.
    B, in_dim, hidden = 8, 16, 32

    key = jax.random.PRNGKey(0)
    kx, kw, kb = jax.random.split(key, 3)

    x = jax.random.normal(kx, (B, in_dim), dtype=jnp.float32)

    # Deterministic PyTorch-like init: U(-1/sqrt(in_dim), 1/sqrt(in_dim)).
    bound = 1.0 / (in_dim ** 0.5)
    w = jax.random.uniform(kw, (hidden, in_dim), minval=-bound, maxval=bound,
                           dtype=jnp.float32)
    b = jax.random.uniform(kb, (hidden,), minval=-bound, maxval=bound,
                           dtype=jnp.float32)
    gamma = jnp.ones((hidden,), dtype=jnp.float32)   # BN weight
    beta = jnp.zeros((hidden,), dtype=jnp.float32)   # BN bias

    out = jax.jit(s_forward)(x, w, b, gamma, beta)
    jax.block_until_ready(out)

    ref = _ref_forward(x, w, b, gamma, beta)
    assert out.shape == (B, hidden)
    # Exact-math formulation (tanh-identity sigmoid, two-pass variance, exact
    # bias cancellation): expected mismatch is only transcendental rounding
    # (~1e-6); tolerance is conservative.
    assert jnp.allclose(out, ref, atol=1e-4, rtol=1e-4), \
        float(jnp.max(jnp.abs(out - ref)))

    print("KERNEL_OK")
</pallas_src>

<mosaic_0001>
module attributes {stable_mosaic.version = 11 : i64} {
  func.func @s_kernel(%arg0: memref<8x16xf32, #tpu.memory_space<vmem>>, %arg1: memref<32x16xf32, #tpu.memory_space<vmem>>, %arg2: memref<1x32xf32, #tpu.memory_space<vmem>>, %arg3: memref<1x32xf32, #tpu.memory_space<vmem>>, %arg4: memref<8x32xf32, #tpu.memory_space<vmem>>) attributes {dimension_semantics = [], scalar_prefetch = 0 : i64, scratch_operands = 0 : i64, tpu.core_type = #tpu.core_type<tc>} {
    %c0 = arith.constant 0 : index
    %c0_0 = arith.constant 0 : index
    %0 = vector.load %arg0[%c0, %c0_0] : memref<8x16xf32, #tpu.memory_space<vmem>>, vector<8x16xf32>
    %c0_1 = arith.constant 0 : index
    %c0_2 = arith.constant 0 : index
    %1 = vector.load %arg1[%c0_1, %c0_2] : memref<32x16xf32, #tpu.memory_space<vmem>>, vector<32x16xf32>
    %cst = arith.constant dense<0.000000e+00> : vector<8x32xf32>
    %2 = tpu.matmul %0, %1, %cst {dimension_numbers = #tpu.dot_dimension_numbers<[1], [1], [0], [0], [0, 0, 1, 0], [], []>} : vector<8x16xf32>, vector<32x16xf32>, vector<8x32xf32> -> vector<8x32xf32>
    %cst_3 = arith.constant dense<0.000000e+00> : vector<32xf32>
    %3 = vector.multi_reduction <add>, %2, %cst_3 [0] : vector<8x32xf32> to vector<32xf32>
    %4 = vector.shape_cast %3 : vector<32xf32> to vector<1x32xf32>
    %cst_4 = arith.constant 1.250000e-01 : f32
    %5 = vector.broadcast %cst_4 : f32 to vector<1x32xf32>
    %6 = arith.mulf %4, %5 : vector<1x32xf32>
    %7 = vector.broadcast %6 : vector<1x32xf32> to vector<8x32xf32>
    %8 = arith.subf %2, %7 : vector<8x32xf32>
    %9 = arith.mulf %8, %8 : vector<8x32xf32>
    %cst_5 = arith.constant dense<0.000000e+00> : vector<32xf32>
    %10 = vector.multi_reduction <add>, %9, %cst_5 [0] : vector<8x32xf32> to vector<32xf32>
    %11 = vector.shape_cast %10 : vector<32xf32> to vector<1x32xf32>
    %cst_6 = arith.constant 1.250000e-01 : f32
    %12 = vector.broadcast %cst_6 : f32 to vector<1x32xf32>
    %13 = arith.mulf %11, %12 : vector<1x32xf32>
    %c0_7 = arith.constant 0 : index
    %c0_8 = arith.constant 0 : index
    %14 = vector.load %arg2[%c0_7, %c0_8] : memref<1x32xf32, #tpu.memory_space<vmem>>, vector<1x32xf32>
    %cst_9 = arith.constant 9.99999974E-6 : f32
    %15 = vector.broadcast %cst_9 : f32 to vector<1x32xf32>
    %16 = arith.addf %13, %15 : vector<1x32xf32>
    %17 = math.rsqrt %16 : vector<1x32xf32>
    %18 = arith.mulf %14, %17 : vector<1x32xf32>
    %19 = vector.broadcast %18 : vector<1x32xf32> to vector<8x32xf32>
    %20 = arith.mulf %8, %19 : vector<8x32xf32>
    %c0_10 = arith.constant 0 : index
    %c0_11 = arith.constant 0 : index
    %21 = vector.load %arg3[%c0_10, %c0_11] : memref<1x32xf32, #tpu.memory_space<vmem>>, vector<1x32xf32>
    %22 = vector.broadcast %21 : vector<1x32xf32> to vector<8x32xf32>
    %23 = arith.addf %20, %22 : vector<8x32xf32>
    %cst_12 = arith.constant 5.000000e-01 : f32
    %24 = vector.broadcast %cst_12 : f32 to vector<8x32xf32>
    %25 = arith.mulf %24, %23 : vector<8x32xf32>
    %26 = math.tanh %25 : vector<8x32xf32>
    %cst_13 = arith.constant 1.000000e+00 : f32
    %27 = vector.broadcast %cst_13 : f32 to vector<8x32xf32>
    %28 = arith.addf %27, %26 : vector<8x32xf32>
    %cst_14 = arith.constant 5.000000e-01 : f32
    %29 = vector.broadcast %cst_14 : f32 to vector<8x32xf32>
    %30 = arith.mulf %29, %28 : vector<8x32xf32>
    %c0_15 = arith.constant 0 : index
    %c0_16 = arith.constant 0 : index
    %31 = vector.load %arg4[%c0_15, %c0_16] : memref<8x32xf32, #tpu.memory_space<vmem>>, vector<8x32xf32>
    tpu.vector_store %arg4[%c0_15, %c0_16], %30 {strides = array<i32>} : memref<8x32xf32, #tpu.memory_space<vmem>>, vector<8x32xf32>,
    return
  }
}

</mosaic_0001>

<llo_original>
// kernel: s_forward.1
$region0: #{s_forward.1}
  #allocation0 [shape = 'u32[]', space=smem, size = 0x4, offset = 0x4, fixed_abs, tag = 'smem constant byte address 0x4 - core index']
  #allocation1 [shape = 'u32[144,128]{1,0:T(1,128)}', space=vmem, size = 0x12000, scoped, tag = 'internal scratch']
  %s0 = inlined_call_operand.vmem [shape: f32[8,16], index: 0, kind: input, shape index: {}]
  %s1 = inlined_call_operand.vmem [shape: f32[32,16], index: 1, kind: input, shape index: {}]
  %s2 = inlined_call_operand.vmem [shape: f32[1,32], index: 2, kind: input, shape index: {}]
  %s3 = inlined_call_operand.vmem [shape: f32[1,32], index: 3, kind: input, shape index: {}]
  %s4 = inlined_call_operand.hbm [shape: f32[8,32], index: 4, kind: output, shape index: {}]
  %s5 = sld [smem:[#allocation0]]
  $region26: #{s_forward.1} parent=0
    _
  %s7 = ssub.s32 1, %s5
  %s8 = scalar_select 0, %s7, %s5
  $region1: #{s_forward.1} parent=0
    #allocation2 [shape = 'u8[4096]{0}', space=vmem, size = 0x1000, scoped, tag = 'output window, operand 0, single buffered']
    #allocation3 [shape = 's32[1]{0}', space=sflag, size = 0x4, scoped, tag = 'scoped memory for s_forward.1']
    %9 = vsyncpa [#allocation3], 0
    // Predicated region
    $region2: #{s_forward.1} parent=1 // pred_check
      _
    $region3: #{s_forward.1} parent=1 // pred_check_branch
      %11 = sbr.rel (0) target = $region5
    $region4: #{s_forward.1} parent=1 // pred_region
      _
    $region5: #{s_forward.1} parent=1 // pred_fallthru
      _
    // Predicated region
    $region6: #{s_forward.1} parent=1 // pred_check
      _
    $region7: #{s_forward.1} parent=1 // pred_check_branch
      %13 = sbr.rel (0) target = $region9
    $region8: #{s_forward.1} parent=1 // pred_region
      _
    $region9: #{s_forward.1} parent=1 // pred_fallthru
      _
    // Predicated region
    $region10: #{s_forward.1} parent=1 // pred_check
      _
    $region11: #{s_forward.1} parent=1 // pred_check_branch
      %15 = sbr.rel (0) target = $region13
    $region12: #{s_forward.1} parent=1 // pred_region
      _
    $region13: #{s_forward.1} parent=1 // pred_fallthru
      _
    // Predicated region
    $region14: #{s_forward.1} parent=1 // pred_check
      _
    $region15: #{s_forward.1} parent=1 // pred_check_branch
      %17 = sbr.rel (0) target = $region17
    $region16: #{s_forward.1} parent=1 // pred_region
      _
    $region17: #{s_forward.1} parent=1 // pred_fallthru
      _
    %v18 = vld [vmem:[%s0] sm:$0xff]
    %v19 = vld [vmem:[%s1] sm:$0xff]
    %v20 = vld [vmem:[%s1 + $0x8] sm:$0xff]
    %v21 = vld [vmem:[%s1 + $0x10] sm:$0xff]
    %v22 = vld [vmem:[%s1 + $0x18] sm:$0xff]
    %vm23 = vcmask 130048
    %v25 = vsel %vm23, %v18, 0
    %v28 = vsel %vm23, %v19, 0
    %v31 = vsel %vm23, %v20, 0
    %v34 = vsel %vm23, %v21, 0
    %v37 = vsel %vm23, %v22, 0
    %39 = vmatprep.subr.mxu0 0.0
    %40 = vmatpush1.xpose.msra.mxu0 %v28
    %41 = vmatprep.subr.mxu0 0.0
    %42 = vmatpush1.xpose.msra.mxu0 %v31
    %43 = vmatprep.subr.mxu0 0.0
    %44 = vmatpush1.xpose.msra.mxu0 %v34
    %45 = vmatprep.subr.mxu0 0.0
    %46 = vmatpush1.xpose.msra.mxu0 %v37
    %47 = vmatprep.subr.mxu0 0.0
    %48 = vmatpush1.xpose.msra.mxu0 0.0
    %49 = vmatprep.subr.mxu0 0.0
    %50 = vmatpush1.xpose.msra.mxu0 0.0
    %51 = vmatprep.subr.mxu0 0.0
    %52 = vmatpush1.xpose.msra.mxu0 0.0
    %53 = vmatprep.subr.mxu0 0.0
    %54 = vmatpush1.xpose.msra.mxu0 0.0
    %55 = vmatprep.subr.mxu0 0.0
    %56 = vmatpush1.xpose.msra.mxu0 0.0
    %57 = vmatprep.subr.mxu0 0.0
    %58 = vmatpush1.xpose.msra.mxu0 0.0
    %59 = vmatprep.subr.mxu0 0.0
    %60 = vmatpush1.xpose.msra.mxu0 0.0
    %61 = vmatprep.subr.mxu0 0.0
    %62 = vmatpush1.xpose.msra.mxu0 0.0
    %63 = vmatprep.subr.mxu0 0.0
    %64 = vmatpush1.xpose.msra.mxu0 0.0
    %65 = vmatprep.subr.mxu0 0.0
    %66 = vmatpush1.xpose.msra.mxu0 0.0
    %67 = vmatprep.subr.mxu0 0.0
    %68 = vmatpush1.xpose.msra.mxu0 0.0
    %69 = vmatprep.subr.mxu0 0.0
    %70 = vmatpush1.xpose.msra.mxu0 0.0
    %71 = vmatprep.subr.mxu0 0.0
    %72 = vmatpush1.xpose.msra.mxu0 0.0
    %73 = vmatprep.subr.mxu0 0.0
    %74 = vmatpush1.xpose.msra.mxu0 0.0
    %75 = vmatprep.subr.mxu0 0.0
    %76 = vmatpush1.xpose.msra.mxu0 0.0
    %77 = vmatprep.subr.mxu0 0.0
    %78 = vmatpush1.xpose.msra.mxu0 0.0
    %79 = vmatprep.subr.mxu0 0.0
    %80 = vmatpush1.xpose.msra.mxu0 0.0
    %81 = vmatprep.subr.mxu0 0.0
    %82 = vmatpush1.xpose.msra.mxu0 0.0
    %83 = vmatprep.subr.mxu0 0.0
    %84 = vmatpush1.xpose.msra.mxu0 0.0
    %85 = vmatprep.subr.mxu0 0.0
    %86 = vmatpush1.xpose.msra.mxu0 0.0
    %87 = vmatprep.subr.mxu0 0.0
    %88 = vmatpush1.xpose.msra.mxu0 0.0
    %89 = vmatprep.subr.mxu0 0.0
    %90 = vmatpush1.xpose.msra.mxu0 0.0
    %91 = vmatprep.subr.mxu0 0.0
    %92 = vmatpush1.xpose.msra.mxu0 0.0
    %93 = vmatprep.subr.mxu0 0.0
    %94 = vmatpush1.xpose.msra.mxu0 0.0
    %95 = vmatprep.subr.mxu0 0.0
    %96 = vmatpush1.xpose.msra.mxu0 0.0
    %97 = vmatprep.subr.mxu0 0.0
    %98 = vmatpush1.xpose.msra.mxu0 0.0
    %99 = vmatprep.subr.mxu0 0.0
    %100 = vmatpush1.xpose.msra.mxu0 0.0
    %101 = vmatprep.subr.mxu0 0.0
    %102 = vmatpush1.xpose.msra.mxu0 0.0
    %103 = vmatprep.mubr.f32.mxu0 0.0
    %104 = vmatmul.mubr.f32.gmra.mrb[0].mxu0 %v25
    %v105 = vpop.f32.mrb[0].mxu0
    %v106 = vadd.f32 0.0, %v105
    %v107 = vpop.f32.mrb[0].mxu0
    %108 = vdwg.mxu0
    %vm109 = vcmask 261120
    %v110 = vsel %vm109, %v106, 0.0
    %v111 = vrot.slane %v110, 4
    %v112 = vadd.f32 %v110, %v111
    %v113 = vrot.slane %v112, 2
    %v114 = vadd.f32 %v112, %v113
    %v115 = vrot.slane %v114, 1
    %v116 = vadd.f32 %v114, %v115
    %v117 = vmul.f32 %v116, 0.125
    %v118 = vsub.f32 %v106, %v117
    %v119 = vmul.f32 %v118, %v118
    %v120 = vsel %vm109, %v119, 0.0
    %v121 = vrot.slane %v120, 4
    %v122 = vadd.f32 %v120, %v121
    %v123 = vrot.slane %v122, 2
    %v124 = vadd.f32 %v122, %v123
    %v125 = vrot.slane %v124, 1
    %v126 = vadd.f32 %v124, %v125
    %v127 = vmul.f32 %v126, 0.125
    %v128 = vld [vmem:[%s2] sm:$0x1]
    %v129 = vadd.f32 %v127, 1e-05
    %v130 = vrsqrt.pop %v129
    %v131 = vmul.f32 %v128, %v130
    %v133 = vlaneseq
    %v134 = vshrl.u32 %v133, 7
    %v135 = vsub.s32 0, %v134
    %v136 = vrot.slane %v131, %v135
    %v138 = vmul.f32 %v118, %v136
    %v139 = vld [vmem:[%s3] sm:$0x1]
    %v141 = vlaneseq
    %v142 = vshrl.u32 %v141, 7
    %v143 = vsub.s32 0, %v142
    %v144 = vrot.slane %v139, %v143
    %v146 = vadd.f32 %v138, %v144
    %v147 = vmul.f32 %v146, 0.5
    %v148 = vtanh.pop %v147
    %v149 = vadd.f32 %v148, 1.0
    %v150 = vmul.f32 %v149, 0.5
    %151 = vst.msk [vmem:[#allocation2] sm:$0xff] %vm109, %v150
    // Predicated region
    $region18: #{s_forward.1} parent=1 // pred_check
      _
    $region19: #{s_forward.1} parent=1 // pred_check_branch
      %153 = sbr.rel (0) target = $region21
    $region20: #{s_forward.1} parent=1 // pred_region
      %s155 = ssub.s32 128, 128
      %156 = vsyncadd [#allocation3], %s155
      %s158 = sshll.u32 [#allocation2], 4
      %s159 = int_to_ptr.vmem [resolvable:$true] %s158
      %161 = dma.vmem_to_hbm [thread:$0]  %s159, 128, %s4, [#allocation3]
    $region21: #{s_forward.1} parent=1 // pred_fallthru
      _
    // Predicated region
    $region22: #{s_forward.1} parent=1 // pred_check
      _
    $region23: #{s_forward.1} parent=1 // pred_check_branch
      %163 = sbr.rel (0) target = $region25
    $region24: #{s_forward.1} parent=1 // pred_region
      %164 = dma.done [#allocation3], 128
    $region25: #{s_forward.1} parent=1 // pred_fallthru
      _
    %165 = vsyncpa [#allocation3], 1

</llo_original>
